<compile_context>
chip_gen: v5e
topology: v5e:2x2
jax: 0.10.0
libtpu: 0.0.40
codegen_flags: <defaults>
</compile_context>

<pallas_src>
import functools
import math

import jax
import jax.numpy as jnp
from jax import lax
from jax.experimental import pallas as pl
from jax.experimental.pallas import tpu as pltpu


# ---------------------------------------------------------------------------
# Kernels
# ---------------------------------------------------------------------------
def _softmax_rows(scores):
    """Numerically stable row softmax; reciprocal on the (otherwise idle) EUP."""
    s_max = jnp.max(scores, axis=-1, keepdims=True)
    e = jnp.exp(scores - s_max)
    denom = jnp.sum(e, axis=-1, keepdims=True)
    return e * pl.reciprocal(denom, approx=True)


def _att_scores_masked_kernel(q_ref, k_ref, m_ref, o_ref, *, inv_sqrt_dk):
    # q_ref: (1,Hb,TQ,D)  k_ref: (1,Hb,Lk,D)  m_ref: (1,TQ,Lk) int8  o_ref: (1,Hb,TQ,Lk)
    q = q_ref[0] * jnp.float32(inv_sqrt_dk)      # fold 1/sqrt(d_k) into the small Q tile
    k = k_ref[0]
    # Contract D with heads batched -> no explicit K transpose (MXU-friendly).
    scores = jnp.einsum("hqd,hkd->hqk", q, k, preferred_element_type=jnp.float32)
    # PyTorch semantics: mask column 0 is always kept -> every row has >= 1
    # finite entry and -inf masking cannot produce NaN.  Done in-kernel (VPU
    # OR, free under the store/HBM bottleneck) instead of a host pass.
    col0 = lax.broadcasted_iota(jnp.int32, m_ref.shape[1:], 1) == 0
    keep = (m_ref[0] != 0) | col0                # (TQ, Lk)
    scores = jnp.where(keep[None], scores, -jnp.inf)
    o_ref[0] = _softmax_rows(scores).astype(o_ref.dtype)


def _att_scores_unmasked_kernel(q_ref, k_ref, o_ref, *, inv_sqrt_dk):
    q = q_ref[0] * jnp.float32(inv_sqrt_dk)
    k = k_ref[0]
    scores = jnp.einsum("hqd,hkd->hqk", q, k, preferred_element_type=jnp.float32)
    o_ref[0] = _softmax_rows(scores).astype(o_ref.dtype)


# ---------------------------------------------------------------------------
# Tiling / VMEM planning
# ---------------------------------------------------------------------------
def _vmem_plan():
    """Returns (TQ cap, working-set byte budget, VMEM capacity), generation aware."""
    cap, budget, vmem_cap = 512, 20 << 20, 64 << 20      # v7x-safe defaults (64 MiB VMEM)
    try:
        info = pltpu.get_tpu_info()
        vmem_cap = int(info.vmem_capacity_bytes)
        if vmem_cap >= (100 << 20):                      # 128 MiB parts: v5e / v6e
            cap, budget = 1024, 48 << 20
            name = ""
            for attr in ("chip_version", "version", "chip_name", "name"):
                v = getattr(info, attr, None)
                if v is not None:
                    name = str(v).lower()
                    break
            # v5e: ~0.8 TB/s HBM, 1 vst slot -> bigger tiles only add VMEM pressure.
            if ("v5" in name) or ("5e" in name) or ("5p" in name):
                cap = 512
    except Exception:
        pass
    return cap, budget, vmem_cap


def _working_set_bytes(tq, hb, Lk, D, out_itemsize, mask_itemsize, in_itemsize):
    """True per-step VMEM working set: double-buffered blocks + f32 intermediates."""
    blocks = (hb * tq * Lk * out_itemsize        # output block
              + tq * Lk * mask_itemsize          # mask block (0 if no mask)
              + hb * tq * D * in_itemsize        # Q block
              + hb * Lk * D * in_itemsize)       # K block
    intermediates = 3 * hb * tq * Lk * 4         # f32 scores / exp / keep (single-buffered)
    return 2 * blocks + intermediates


def _pick_q_tile(Lq, Lk, D, out_itemsize, mask_itemsize, in_itemsize, cap, budget):
    """Largest TQ dividing Lq, aligned (32 for int8 mask, else 8), fitting the budget."""
    step = 32 if mask_itemsize else 8            # int8 native tiling is (32,128)
    candidates = sorted({t for t in range(step, Lq + 1, step) if Lq % t == 0} | {Lq},
                        reverse=True)
    for t in candidates:
        if t <= cap and _working_set_bytes(t, 1, Lk, D, out_itemsize,
                                           mask_itemsize, in_itemsize) <= budget:
            return t
    return candidates[-1]                        # smallest / ragged fallback (full extent)


def _pick_head_block(H, tq, Lk, D, out_itemsize, mask_itemsize, in_itemsize, budget):
    """Fold a block of heads per grid step when per-step work is small (amortize
    the ~0.35 us step overhead, reuse the mask in VMEM across Hb heads)."""
    SMALL_WORK = 128 * 1024                      # score elements below which we fold heads
    if tq * Lk >= SMALL_WORK:
        return 1
    hb = 1
    for cand in sorted(d for d in range(1, H + 1) if H % d == 0):
        if cand * tq * Lk > 4 * SMALL_WORK:
            break
        if _working_set_bytes(tq, cand, Lk, D, out_itemsize,
                              mask_itemsize, in_itemsize) <= budget:
            hb = cand
    return hb


# ---------------------------------------------------------------------------
# Plain-XLA fallback (degenerate long-Lk working sets)
# ---------------------------------------------------------------------------
def _att_scores_xla(query, key, mask, out_dtype):
    d_k = query.shape[-1]
    scores = jnp.einsum("bhqd,bhkd->bhqk", query, key) / math.sqrt(d_k)
    if mask is not None:
        keep = (mask != 0) | (jnp.arange(mask.shape[-1]) == 0)[None, None, :]
        scores = jnp.where(keep[:, None, :, :], scores, -jnp.inf)
    return jax.nn.softmax(scores, axis=-1).astype(out_dtype)


# ---------------------------------------------------------------------------
# Public wrapper
# ---------------------------------------------------------------------------
def att_scores(query, key, mask=None, p_dropout: float = 0.0,
               training: bool = False, out_dtype=jnp.float32):
    """query/key: [B, H, L, D] float32; mask: [B, Lq, Lk] bool/int (or None).

    Returns alpha: [B, H, Lq, Lk] in `out_dtype`.  float32 by default (matches
    the PyTorch module); pass jnp.bfloat16 when the consumer is bf16 (alpha @ V)
    to halve the dominant HBM writeback and double the usable q-tile on v7x.
    """
    if training and p_dropout > 0.0:
        # TODO(synk): training-mode dropout (pltpu.prng_seed + stateful_bernoulli) not implemented.
        raise NotImplementedError(
            "attScores Pallas kernel implements the eval path (dropout = identity).")

    B, H, Lq, D = query.shape
    Lk = key.shape[2]
    inv_sqrt_dk = 1.0 / math.sqrt(D)

    out_itemsize = jnp.dtype(out_dtype).itemsize
    mask_itemsize = 0 if mask is None else 1
    in_itemsize = jnp.dtype(query.dtype).itemsize

    cap, budget, vmem_cap = _vmem_plan()
    tq = _pick_q_tile(Lq, Lk, D, out_itemsize, mask_itemsize, in_itemsize, cap, budget)
    hb = _pick_head_block(H, tq, Lk, D, out_itemsize, mask_itemsize, in_itemsize, budget)
    nq = Lq // tq
    nh = H // hb

    headroom = 8 << 20
    ws = _working_set_bytes(tq, hb, Lk, D, out_itemsize, mask_itemsize, in_itemsize)
    if ws > vmem_cap - 2 * headroom:
        # TODO(synk): kj-tiled two-pass softmax kernel for very long Lk; XLA fallback for now.
        return _att_scores_xla(query, key, mask, out_dtype)

    # vmem_limit derived from the true working set, clamped to the chip's
    # physical VMEM minus headroom (never exceeds 64 MiB on v7x).
    vmem_limit = int(min(max(32 << 20, ws + headroom), vmem_cap - headroom))

    # Grid-axis ordering: the block whose per-step bytes are larger should keep
    # a constant block index across the innermost axis so its DMA is elided.
    #   K block per step:    hb * Lk * D * in_itemsize
    #   mask block per step: tq * Lk * mask_itemsize
    if mask is None:
        qi_inner = True                                   # pure win: reuse K across q-tiles
    else:
        qi_inner = hb * D * in_itemsize > tq * mask_itemsize

    if qi_inner:
        grid = (B, nh, nq)
        qmap = lambda b, hg, qi: (b, hg, qi, 0)
        kmap = lambda b, hg, qi: (b, hg, 0, 0)
        omap = lambda b, hg, qi: (b, hg, qi, 0)
        mmap = lambda b, hg, qi: (b, qi, 0)
    else:
        grid = (B, nq, nh)
        qmap = lambda b, qi, hg: (b, hg, qi, 0)
        kmap = lambda b, qi, hg: (b, hg, 0, 0)
        omap = lambda b, qi, hg: (b, hg, qi, 0)
        mmap = lambda b, qi, hg: (b, qi, 0)

    q_spec = pl.BlockSpec((1, hb, tq, D), qmap)
    k_spec = pl.BlockSpec((1, hb, Lk, D), kmap)
    o_spec = pl.BlockSpec((1, hb, tq, Lk), omap)

    compiler_params = pltpu.CompilerParams(
        dimension_semantics=("parallel", "parallel", "parallel"),   # no accumulation anywhere
        vmem_limit_bytes=vmem_limit)

    out_shape = jax.ShapeDtypeStruct((B, H, Lq, Lk), out_dtype)

    if mask is None:
        # Fast path: no mask input at all (no ones() materialization, zero mask DMA).
        kernel = functools.partial(_att_scores_unmasked_kernel, inv_sqrt_dk=inv_sqrt_dk)
        return pl.pallas_call(
            kernel,
            out_shape=out_shape,
            grid_spec=pltpu.PrefetchScalarGridSpec(
                num_scalar_prefetch=0, grid=grid,
                in_specs=[q_spec, k_spec], out_specs=o_spec),
            compiler_params=compiler_params,
        )(query, key)

    # Ship the raw mask as int8 (4x less HBM traffic than int32); the PyTorch
    # "column 0 always kept" fix is applied inside the kernel.
    mask_i8 = mask.astype(jnp.int8)
    m_spec = pl.BlockSpec((1, tq, Lk), mmap)

    kernel = functools.partial(_att_scores_masked_kernel, inv_sqrt_dk=inv_sqrt_dk)
    return pl.pallas_call(
        kernel,
        out_shape=out_shape,
        grid_spec=pltpu.PrefetchScalarGridSpec(
            num_scalar_prefetch=0, grid=grid,
            in_specs=[q_spec, k_spec, m_spec], out_specs=o_spec),
        compiler_params=compiler_params,
    )(query, key, mask_i8)


# ---------------------------------------------------------------------------
# Pure-JAX reference (mirrors the PyTorch forward, eval mode)
# ---------------------------------------------------------------------------
def _reference(query, key, mask):
    d_k = query.shape[-1]
    scores = jnp.einsum("bhqd,bhkd->bhqk", query, key) / math.sqrt(d_k)
    if mask is not None:
        m = mask.astype(jnp.bool_).at[:, :, 0].set(True)[:, None, :, :]
        scores = jnp.where(m, scores, -jnp.inf)
    return jax.nn.softmax(scores, axis=-1)


if __name__ == "__main__":
    # small shapes consistent with the module: batch=2, heads=2, seq=8, head_dim=16
    B, H, L, D = 2, 2, 8, 16
    rng = jax.random.PRNGKey(0)
    kq, kk, km = jax.random.split(rng, 3)

    q = jax.random.normal(kq, (B, H, L, D), dtype=jnp.float32)
    k = jax.random.normal(kk, (B, H, L, D), dtype=jnp.float32)
    # boolean mask [B, q_len, k_len]; rows may be all-False -> first col kept in-kernel
    mask = jax.random.bernoulli(km, p=0.6, shape=(B, L, L))

    alpha = att_scores(q, k, mask, p_dropout=0.0)                          # masked path
    alpha_nm = att_scores(q, k, None, p_dropout=0.0)                       # mask=None fast path
    alpha_bf16 = att_scores(q, k, mask, p_dropout=0.0, out_dtype=jnp.bfloat16)  # bf16 writeback
    jax.block_until_ready((alpha, alpha_nm, alpha_bf16))

    ref = _reference(q, k, mask)
    ref_nm = _reference(q, k, None)

    assert alpha.shape == (B, H, L, L)
    assert jnp.allclose(alpha, ref, atol=2e-3, rtol=2e-3), "masked mismatch vs reference"
    assert jnp.allclose(alpha_nm, ref_nm, atol=2e-3, rtol=2e-3), "unmasked mismatch vs reference"
    assert jnp.allclose(alpha_bf16.astype(jnp.float32), ref, atol=1.5e-2, rtol=1.5e-2), \
        "bf16-output mismatch vs reference"
    print("KERNEL_OK")
</pallas_src>

<mosaic_0001>
module attributes {stable_mosaic.version = 11 : i64} {
  func.func @_att_scores_masked_kernel(%arg0: i32, %arg1: i32, %arg2: i32, %arg3: memref<1x2x8x16xf32, #tpu.memory_space<vmem>>, %arg4: memref<1x2x8x16xf32, #tpu.memory_space<vmem>>, %arg5: memref<1x8x8xi8, #tpu.memory_space<vmem>>, %arg6: memref<1x2x8x8xf32, #tpu.memory_space<vmem>>) attributes {dimension_semantics = [#tpu.dimension_semantics<parallel>, #tpu.dimension_semantics<parallel>, #tpu.dimension_semantics<parallel>], iteration_bounds = array<i64: 2, 1, 1>, scalar_prefetch = 0 : i64, scratch_operands = 0 : i64, tpu.core_type = #tpu.core_type<tc>, window_params = [{transform_indices = @transform_0, window_bounds = array<i64: 1, 2, 8, 16>}, {transform_indices = @transform_1, window_bounds = array<i64: 1, 2, 8, 16>}, {transform_indices = @transform_2, window_bounds = array<i64: 1, 8, 8>}, {transform_indices = @transform_3, window_bounds = array<i64: 1, 2, 8, 8>}]} {
    %c0 = arith.constant 0 : index
    %c0_0 = arith.constant 0 : index
    %c0_1 = arith.constant 0 : index
    %c0_2 = arith.constant 0 : index
    %0 = vector.load %arg3[%c0, %c0_0, %c0_1, %c0_2] : memref<1x2x8x16xf32, #tpu.memory_space<vmem>>, vector<1x2x8x16xf32>
    %1 = vector.shape_cast %0 : vector<1x2x8x16xf32> to vector<2x8x16xf32>
    %cst = arith.constant 2.500000e-01 : f32
    %2 = vector.broadcast %cst : f32 to vector<2x8x16xf32>
    %3 = arith.mulf %1, %2 : vector<2x8x16xf32>
    %c0_3 = arith.constant 0 : index
    %c0_4 = arith.constant 0 : index
    %c0_5 = arith.constant 0 : index
    %c0_6 = arith.constant 0 : index
    %4 = vector.load %arg4[%c0_3, %c0_4, %c0_5, %c0_6] : memref<1x2x8x16xf32, #tpu.memory_space<vmem>>, vector<1x2x8x16xf32>
    %5 = vector.shape_cast %4 : vector<1x2x8x16xf32> to vector<2x8x16xf32>
    "tpu.trace_start"() <{level = 10 : i32, message = "hqd,hkd->hqk"}> : () -> ()
    %cst_7 = arith.constant dense<0.000000e+00> : vector<2x8x8xf32>
    %6 = tpu.matmul %3, %5, %cst_7 {dimension_numbers = #tpu.dot_dimension_numbers<[2], [2], [1], [1], [0, 0, 0, 1, 1, 1], [0], [0]>} : vector<2x8x16xf32>, vector<2x8x16xf32>, vector<2x8x8xf32> -> vector<2x8x8xf32>
    "tpu.trace_stop"() : () -> ()
    %7 = tpu.iota {dimensions = array<i32: 1>} : vector<8x8xi32>
    %c0_i32 = arith.constant 0 : i32
    %8 = vector.broadcast %c0_i32 : i32 to vector<8x8xi32>
    %9 = arith.cmpi eq, %7, %8 : vector<8x8xi32>
    %c0_8 = arith.constant 0 : index
    %c0_9 = arith.constant 0 : index
    %c0_10 = arith.constant 0 : index
    %10 = vector.load %arg5[%c0_8, %c0_9, %c0_10] : memref<1x8x8xi8, #tpu.memory_space<vmem>>, vector<1x8x8xi8>
    %11 = vector.shape_cast %10 : vector<1x8x8xi8> to vector<8x8xi8>
    %c0_i8 = arith.constant 0 : i8
    %12 = vector.broadcast %c0_i8 : i8 to vector<8x8xi8>
    %13 = arith.cmpi ne, %11, %12 : vector<8x8xi8>
    %14 = arith.ori %13, %9 : vector<8x8xi1>
    %15 = vector.shape_cast %14 : vector<8x8xi1> to vector<1x8x8xi1>
    %cst_11 = arith.constant 0xFF800000 : f32
    %16 = vector.shape_cast %15 : vector<1x8x8xi1> to vector<1x8x8xi1>
    %17 = vector.broadcast %16 : vector<1x8x8xi1> to vector<2x8x8xi1>
    %18 = vector.broadcast %cst_11 : f32 to vector<2x8x8xf32>
    %19 = arith.select %17, %6, %18 : vector<2x8x8xi1>, vector<2x8x8xf32>
    %cst_12 = arith.constant dense<0xFF800000> : vector<2x8xf32>
    %20 = vector.multi_reduction <maximumf>, %19, %cst_12 [2] : vector<2x8x8xf32> to vector<2x8xf32>
    %21 = vector.shape_cast %20 : vector<2x8xf32> to vector<2x8x1xf32>
    %22 = vector.broadcast %21 : vector<2x8x1xf32> to vector<2x8x8xf32>
    %23 = arith.subf %19, %22 : vector<2x8x8xf32>
    %24 = math.exp %23 : vector<2x8x8xf32>
    %cst_13 = arith.constant dense<0.000000e+00> : vector<2x8xf32>
    %25 = vector.multi_reduction <add>, %24, %cst_13 [2] : vector<2x8x8xf32> to vector<2x8xf32>
    %26 = vector.shape_cast %25 : vector<2x8xf32> to vector<2x8x1xf32>
    %27 = tpu.reciprocal %26 {approx = true} : vector<2x8x1xf32> -> vector<2x8x1xf32>
    %28 = vector.broadcast %27 : vector<2x8x1xf32> to vector<2x8x8xf32>
    %29 = arith.mulf %24, %28 : vector<2x8x8xf32>
    %c0_14 = arith.constant 0 : index
    %c0_15 = arith.constant 0 : index
    %c0_16 = arith.constant 0 : index
    %c0_17 = arith.constant 0 : index
    %30 = vector.load %arg6[%c0_14, %c0_15, %c0_16, %c0_17] : memref<1x2x8x8xf32, #tpu.memory_space<vmem>>, vector<1x2x8x8xf32>
    %31 = vector.shape_cast %30 : vector<1x2x8x8xf32> to vector<2x8x8xf32>
    %32 = vector.shape_cast %29 : vector<2x8x8xf32> to vector<1x2x8x8xf32>
    tpu.vector_store %arg6[%c0_14, %c0_15, %c0_16, %c0_17], %32 {strides = array<i32>} : memref<1x2x8x8xf32, #tpu.memory_space<vmem>>, vector<1x2x8x8xf32>,
    return
  }
  func.func @transform_0(%arg0: i32, %arg1: i32, %arg2: i32) -> (i32, i32, i32, i32) {
    %c0_i32 = arith.constant 0 : i32
    %c0_i32_0 = arith.constant 0 : i32
    return %arg0, %arg1, %arg2, %c0_i32 : i32, i32, i32, i32
  }
  func.func @transform_1(%arg0: i32, %arg1: i32, %arg2: i32) -> (i32, i32, i32, i32) {
    %c0_i32 = arith.constant 0 : i32
    %c0_i32_0 = arith.constant 0 : i32
    %c0_i32_1 = arith.constant 0 : i32
    return %arg0, %arg1, %c0_i32, %c0_i32_0 : i32, i32, i32, i32
  }
  func.func @transform_2(%arg0: i32, %arg1: i32, %arg2: i32) -> (i32, i32, i32) {
    %c0_i32 = arith.constant 0 : i32
    %c0_i32_0 = arith.constant 0 : i32
    return %arg0, %arg2, %c0_i32 : i32, i32, i32
  }
  func.func @transform_3(%arg0: i32, %arg1: i32, %arg2: i32) -> (i32, i32, i32, i32) {
    %c0_i32 = arith.constant 0 : i32
    %c0_i32_0 = arith.constant 0 : i32
    return %arg0, %arg1, %arg2, %c0_i32 : i32, i32, i32, i32
  }
}

</mosaic_0001>

<llo_original>
// kernel: tpu_custom_call.1
$region0: #{tpu_custom_call.1}
  #allocation0 [shape = 'u32[]', space=smem, size = 0x4, offset = 0x4, fixed_abs, tag = 'smem constant byte address 0x4 - core index']
  #allocation1 [shape = 'u32[72,128]{1,0:T(1,128)}', space=vmem, size = 0x9000, scoped, tag = 'internal scratch']
  %s0 = inlined_call_operand.hbm [shape: f32[2,2,8,16], index: 0, kind: input, shape index: {}]
  %s1 = inlined_call_operand.hbm [shape: f32[2,2,8,16], index: 1, kind: input, shape index: {}]
  %s2 = inlined_call_operand.hbm [shape: s8[2,8,8], index: 2, kind: input, shape index: {}]
  %s3 = inlined_call_operand.hbm [shape: f32[2,2,8,8], index: 3, kind: output, shape index: {}]
  %s4 = sld [smem:[#allocation0]]
  $region57: #{tpu_custom_call.1} parent=0
    _
  %s6 = ssub.s32 1, %s4
  %s7 = scalar_select 0, %s6, %s4
  $region1: #{tpu_custom_call.1} parent=0
    #allocation2 [shape = 'u8[16384]{0}', space=vmem, size = 0x4000, scoped, tag = 'input window, operand 0']
    #allocation3 [shape = 's32[2]{0}', space=sflag, size = 0x8, scoped, tag = 'scoped memory for tpu_custom_call.1']
    #allocation4 [shape = 's32[2]{0}', space=sflag, size = 0x8, scoped, tag = 'scoped memory for tpu_custom_call.1']
    #allocation5 [shape = 'u8[16384]{0}', space=vmem, size = 0x4000, scoped, tag = 'input window, operand 1']
    #allocation6 [shape = 's32[2]{0}', space=sflag, size = 0x8, scoped, tag = 'scoped memory for tpu_custom_call.1']
    #allocation7 [shape = 'u8[2048]{0}', space=vmem, size = 0x800, scoped, tag = 'input window, operand 2']
    #allocation8 [shape = 'u8[16384]{0}', space=vmem, size = 0x4000, scoped, tag = 'output window, operand 0']
    %8 = vsyncpa [#allocation3], 0
    %s9 = scalar_lea.sflag [#allocation3], 1
    %10 = vsyncpa %s9, 0
    %11 = vsyncpa [#allocation6], 0
    %s12 = scalar_lea.sflag [#allocation6], 1
    %13 = vsyncpa %s12, 0
    %14 = vsyncpa [#allocation4], 0
    %s15 = scalar_lea.sflag [#allocation4], 1
    %16 = vsyncpa %s15, 0
    loop: start=0, step=1, limit=4
    $region2: #{tpu_custom_call.1} parent=1 // loop_pre_header
      _
    $region3: #{tpu_custom_call.1} parent=1 // loop_header
      %s18 = sphi 0, %s22
      %p19 = scmp.ge.s32.totalorder %s18, 4
      %s25 = sphi 0, %s44
      %s26 = sphi 0, %s40
      %s27 = sphi 0, %s36
      %s28 = sphi 0, %s25
      %s29 = sphi 0, %s26
      %s30 = sphi 0, %s27
      %s31 = sphi 0, %s28
      %s32 = sphi 0, %s29
      %s33 = sphi 0, %s30
      %s51 = sphi 0, %s53
      %s54 = sphi 0, %s51
      %s55 = sphi 0, %s54
      %s71 = sphi 0, %s55
      %s79 = sphi 0, %s81
      %s82 = sphi 0, %s79
      %s83 = sphi 0, %s82
      %s99 = sphi 0, %s83
      %s107 = sphi 0, %s109
      %s110 = sphi 0, %s107
      %s111 = sphi 0, %s110
      %s127 = sphi 0, %s111
      %s137 = sphi 0, %s139
      %s140 = sphi 0, %s137
      %s141 = sphi 0, %s140
      %s157 = sphi 0, %s141
    $region4: #{tpu_custom_call.1} parent=1 // loop_header_branch
      %21 = sbr.rel (%p19) target = $region8
    $region5: #{tpu_custom_call.1} parent=1 // loop_body
      %s23 = ssub.s32 %s18, 1
      %s24 = ssub.s32 %s18, 2
      %s34 = sadd.s32 1, %s27
      %p35 = scmp.ge.s32.totalorder %s34, 1
      %s36 = scalar_select %p35, 0, %s34
      %s37 = sadd.s32 1, %s26
      %s38 = scalar_select %p35, %s37, %s26
      %p39 = scmp.ge.s32.totalorder %s38, 1
      %s40 = scalar_select %p39, 0, %s38
      %s41 = sadd.s32 1, %s25
      %s42 = scalar_select %p39, %s41, %s25
      %p43 = scmp.ge.s32.totalorder %s42, 2
      %s44 = scalar_select %p43, 0, %s42
      %s45 = ssub.s32 %s25, %s44
      %s46 = ssub.s32 %s26, %s40
      %s47 = sor.u32 %s45, %s46
      %s48 = ssub.s32 %s27, %s36
      %s49 = sor.u32 %s47, %s48
      %p50 = scmp.eq.s32.totalorder %s49, 0
      %s52 = sadd.s32 %s51, 1
      %s53 = scalar_select %p50, %s51, %s52
      %p56 = pneg %p50
      %p57 = scmp.eq.s32.totalorder %s18, 1
      %p58 = por %p56, %p57
      %p59 = scmp.ne.s32.totalorder %s51, %s54
      %p60 = scmp.eq.s32.totalorder %s18, 0
      %p61 = por %p59, %p60
      %p62 = scmp.ne.s32.totalorder %s51, %s54
      %p63 = scmp.eq.s32.totalorder %s23, 1
      %p64 = por %p62, %p63
      %p65 = scmp.ne.s32.totalorder %s54, %s55
      %p66 = scmp.eq.s32.totalorder %s23, 0
      %p67 = por %p65, %p66
      %p68 = scmp.ne.s32.totalorder %s54, %s55
      %p69 = scmp.eq.s32.totalorder %s24, 1
      %p70 = por %p68, %p69
      %p72 = scmp.ne.s32.totalorder %s55, %s71
      %p73 = scmp.eq.s32.totalorder %s24, 0
      %p74 = por %p72, %p73
      %s75 = ssub.s32 %s25, %s44
      %s76 = ssub.s32 %s26, %s40
      %s77 = sor.u32 %s75, %s76
      %p78 = scmp.eq.s32.totalorder %s77, 0
      %s80 = sadd.s32 %s79, 1
      %s81 = scalar_select %p78, %s79, %s80
      %p84 = pneg %p78
      %p85 = scmp.eq.s32.totalorder %s18, 1
      %p86 = por %p84, %p85
      %p87 = scmp.ne.s32.totalorder %s79, %s82
      %p88 = scmp.eq.s32.totalorder %s18, 0
      %p89 = por %p87, %p88
      %p90 = scmp.ne.s32.totalorder %s79, %s82
      %p91 = scmp.eq.s32.totalorder %s23, 1
      %p92 = por %p90, %p91
      %p93 = scmp.ne.s32.totalorder %s82, %s83
      %p94 = scmp.eq.s32.totalorder %s23, 0
      %p95 = por %p93, %p94
      %p96 = scmp.ne.s32.totalorder %s82, %s83
      %p97 = scmp.eq.s32.totalorder %s24, 1
      %p98 = por %p96, %p97
      %p100 = scmp.ne.s32.totalorder %s83, %s99
      %p101 = scmp.eq.s32.totalorder %s24, 0
      %p102 = por %p100, %p101
      %s103 = ssub.s32 %s25, %s44
      %s104 = ssub.s32 %s27, %s36
      %s105 = sor.u32 %s103, %s104
      %p106 = scmp.eq.s32.totalorder %s105, 0
      %s108 = sadd.s32 %s107, 1
      %s109 = scalar_select %p106, %s107, %s108
      %p112 = pneg %p106
      %p113 = scmp.eq.s32.totalorder %s18, 1
      %p114 = por %p112, %p113
      %p115 = scmp.ne.s32.totalorder %s107, %s110
      %p116 = scmp.eq.s32.totalorder %s18, 0
      %p117 = por %p115, %p116
      %p118 = scmp.ne.s32.totalorder %s107, %s110
      %p119 = scmp.eq.s32.totalorder %s23, 1
      %p120 = por %p118, %p119
      %p121 = scmp.ne.s32.totalorder %s110, %s111
      %p122 = scmp.eq.s32.totalorder %s23, 0
      %p123 = por %p121, %p122
      %p124 = scmp.ne.s32.totalorder %s110, %s111
      %p125 = scmp.eq.s32.totalorder %s24, 1
      %p126 = por %p124, %p125
      %p128 = scmp.ne.s32.totalorder %s111, %s127
      %p129 = scmp.eq.s32.totalorder %s24, 0
      %p130 = por %p128, %p129
      %s131 = ssub.s32 %s25, %s44
      %s132 = ssub.s32 %s26, %s40
      %s133 = sor.u32 %s131, %s132
      %s134 = ssub.s32 %s27, %s36
      %s135 = sor.u32 %s133, %s134
      %p136 = scmp.eq.s32.totalorder %s135, 0
      %s138 = sadd.s32 %s137, 1
      %s139 = scalar_select %p136, %s137, %s138
      %p142 = pneg %p136
      %p143 = scmp.eq.s32.totalorder %s18, 1
      %p144 = por %p142, %p143
      %p145 = scmp.ne.s32.totalorder %s137, %s140
      %p146 = scmp.eq.s32.totalorder %s18, 0
      %p147 = por %p145, %p146
      %p148 = scmp.ne.s32.totalorder %s137, %s140
      %p149 = scmp.eq.s32.totalorder %s23, 1
      %p150 = por %p148, %p149
      %p151 = scmp.ne.s32.totalorder %s140, %s141
      %p152 = scmp.eq.s32.totalorder %s23, 0
      %p153 = por %p151, %p152
      %p154 = scmp.ne.s32.totalorder %s140, %s141
      %p155 = scmp.eq.s32.totalorder %s24, 1
      %p156 = por %p154, %p155
      %p158 = scmp.ne.s32.totalorder %s141, %s157
      %p159 = scmp.eq.s32.totalorder %s24, 0
      %p160 = por %p158, %p159
      %p161 = scmp.le.s32.totalorder 1, %s18
      %p162 = scmp.lt.s32.totalorder %s18, 3
      %p163 = pnand %p161, %p162
      %p164 = pneg %p163
      // Predicated region
      $region9: #{tpu_custom_call.1} parent=5 // pred_check
        _
      $region10: #{tpu_custom_call.1} parent=5 // pred_check_branch
        %166 = sbr.rel (%p163) target = $region12
      $region11: #{tpu_custom_call.1} parent=5 // pred_region
        %s167 = ssub.s32 %s18, 1
      $region12: #{tpu_custom_call.1} parent=5 // pred_fallthru
        _
      %p168 = scmp.lt.s32.totalorder %s18, 2
      // Predicated region
      $region13: #{tpu_custom_call.1} parent=5 // pred_check
        %p169 = pneg %p168
      $region14: #{tpu_custom_call.1} parent=5 // pred_check_branch
        %171 = sbr.rel (%p169) target = $region16
      $region15: #{tpu_custom_call.1} parent=5 // pred_region
        // Predicated region
        $region17: #{tpu_custom_call.1} parent=15 // pred_check
          %p172 = pneg %p61
        $region18: #{tpu_custom_call.1} parent=15 // pred_check_branch
          %174 = sbr.rel (%p172) target = $region20
        $region19: #{tpu_custom_call.1} parent=15 // pred_region
          %s175 = sand.u32 %s51, 1
          %s176 = scalar_lea.sflag [#allocation3], %s175
          %s177 = sand.u32 %s51, 1
          %s178 = smul.addr %s177, 16
          %s179 = scalar_lea.vmem [#allocation2], %s178
          %s180 = smul.u32 2, %s26
          %182 = vsyncadd %s176, 0
          %s183 = sadd.s32 %s27, %s180
          %s184 = smul.addr %s25, 2
          %s185 = sadd.s32 %s183, %s184
          %s186 = smul.addr %s185, 8
          %s187 = scalar_lea.hbm %s0, %s186
          %s188 = sshll.u32 %s187, 4
          %s189 = int_to_ptr.hbm [resolvable:$true] %s188
          %s190 = sshll.u32 %s179, 4
          %s191 = int_to_ptr.vmem [resolvable:$true] %s190
          %196 = dma.hbm_to_vmem [thread:$0]  %s189, 256, %s191, %s176, 128, 128, 8
        $region20: #{tpu_custom_call.1} parent=15 // pred_fallthru
          _
        // Predicated region
        $region21: #{tpu_custom_call.1} parent=15 // pred_check
          %p197 = pneg %p89
        $region22: #{tpu_custom_call.1} parent=15 // pred_check_branch
          %199 = sbr.rel (%p197) target = $region24
        $region23: #{tpu_custom_call.1} parent=15 // pred_region
          %s200 = sand.u32 %s18, 1
          %s201 = scalar_lea.sflag [#allocation6], %s200
          %s202 = sand.u32 %s79, 1
          %s203 = smul.addr %s202, 16
          %s204 = scalar_lea.vmem [#allocation5], %s203
          %s205 = smul.u32 2, %s26
          %207 = vsyncadd %s201, 0
          %s208 = smul.addr %s25, 2
          %s209 = sadd.s32 %s205, %s208
          %s210 = smul.addr %s209, 8
          %s211 = scalar_lea.hbm %s1, %s210
          %s212 = sshll.u32 %s211, 4
          %s213 = int_to_ptr.hbm [resolvable:$true] %s212
          %s214 = sshll.u32 %s204, 4
          %s215 = int_to_ptr.vmem [resolvable:$true] %s214
          %220 = dma.hbm_to_vmem [thread:$0]  %s213, 256, %s215, %s201, 128, 128, 8
        $region24: #{tpu_custom_call.1} parent=15 // pred_fallthru
          _
        // Predicated region
        $region25: #{tpu_custom_call.1} parent=15 // pred_check
          %p221 = pneg %p117
        $region26: #{tpu_custom_call.1} parent=15 // pred_check_branch
          %223 = sbr.rel (%p221) target = $region28
        $region27: #{tpu_custom_call.1} parent=15 // pred_region
          %s224 = sand.u32 %s18, 1
          %s225 = scalar_lea.sflag [#allocation6], %s224
          %s226 = sand.u32 %s107, 1
          %s227 = smul.addr %s226, 2
          %s228 = scalar_lea.vmem [#allocation7], %s227
          %230 = vsyncadd %s225, 0
          %s231 = sadd.s32 %s27, %s25
          %s232 = smul.addr %s231, 2
          %s233 = scalar_lea.hbm %s2, %s232
          %s235 = sshll.u32 %s233, 4
          %s236 = int_to_ptr.hbm [resolvable:$true] %s235
          %s237 = sshll.u32 %s228, 4
          %s238 = int_to_ptr.vmem [resolvable:$true] %s237
          %240 = dma.hbm_to_vmem [thread:$0]  %s236, 32, %s238, %s225
        $region28: #{tpu_custom_call.1} parent=15 // pred_fallthru
          _
      $region16: #{tpu_custom_call.1} parent=5 // pred_fallthru
        _
      %p241 = scmp.le.s32.totalorder 1, %s18
      %p242 = scmp.lt.s32.totalorder %s18, 3
      %p243 = pnand %p241, %p242
      %p244 = pneg %p243
      // Predicated region
      $region29: #{tpu_custom_call.1} parent=5 // pred_check
        _
      $region30: #{tpu_custom_call.1} parent=5 // pred_check_branch
        %246 = sbr.rel (%p243) target = $region32
      $region31: #{tpu_custom_call.1} parent=5 // pred_region
        %s247 = ssub.s32 %s18, 1
        %s248 = sand.u32 %s54, 1
        %s249 = scalar_lea.sflag [#allocation3], %s248
        %s250 = sand.u32 %s54, 1
        %s251 = smul.addr %s250, 16
        %s252 = scalar_lea.vmem [#allocation2], %s251
        // Predicated region
        $region33: #{tpu_custom_call.1} parent=31 // pred_check
          %p253 = pneg %p67
        $region34: #{tpu_custom_call.1} parent=31 // pred_check_branch
          %255 = sbr.rel (%p253) target = $region36
        $region35: #{tpu_custom_call.1} parent=31 // pred_region
          %257 = dma.done %s249, 256
        $region36: #{tpu_custom_call.1} parent=31 // pred_fallthru
          _
        %s258 = sand.u32 %s23, 1
        %s259 = scalar_lea.sflag [#allocation6], %s258
        %s260 = sand.u32 %s82, 1
        %s261 = smul.addr %s260, 16
        %s262 = scalar_lea.vmem [#allocation5], %s261
        // Predicated region
        $region37: #{tpu_custom_call.1} parent=31 // pred_check
          %p263 = pneg %p95
        $region38: #{tpu_custom_call.1} parent=31 // pred_check_branch
          %265 = sbr.rel (%p263) target = $region40
        $region39: #{tpu_custom_call.1} parent=31 // pred_region
          %267 = dma.done %s259, 256
        $region40: #{tpu_custom_call.1} parent=31 // pred_fallthru
          _
        %s268 = sand.u32 %s23, 1
        %s269 = scalar_lea.sflag [#allocation6], %s268
        %s270 = sand.u32 %s110, 1
        %s271 = smul.addr %s270, 2
        %s272 = scalar_lea.vmem [#allocation7], %s271
        // Predicated region
        $region41: #{tpu_custom_call.1} parent=31 // pred_check
          %p273 = pneg %p123
        $region42: #{tpu_custom_call.1} parent=31 // pred_check_branch
          %275 = sbr.rel (%p273) target = $region44
        $region43: #{tpu_custom_call.1} parent=31 // pred_region
          %277 = dma.done %s269, 32
        $region44: #{tpu_custom_call.1} parent=31 // pred_fallthru
          _
        %s278 = sand.u32 %s54, 1
        %s279 = scalar_lea.sflag [#allocation3], %s278
        %s280 = sand.u32 %s54, 1
        %s281 = smul.addr %s280, 16
        %s282 = scalar_lea.vmem [#allocation2], %s281
        %p283 = pneg %p67
        %p284 = pneg %p64
        %s285 = sand.u32 %s23, 1
        %s286 = scalar_lea.sflag [#allocation6], %s285
        %s287 = sand.u32 %s82, 1
        %s288 = smul.addr %s287, 16
        %s289 = scalar_lea.vmem [#allocation5], %s288
        %p290 = pneg %p95
        %p291 = pneg %p92
        %s292 = sand.u32 %s23, 1
        %s293 = scalar_lea.sflag [#allocation6], %s292
        %s294 = sand.u32 %s110, 1
        %s295 = smul.addr %s294, 2
        %s296 = scalar_lea.vmem [#allocation7], %s295
        %p297 = pneg %p123
        %p298 = pneg %p120
        %p299 = pneg %p153
        %p300 = pneg %p150
        %s301 = sand.u32 %s140, 1
        %s302 = scalar_lea.sflag [#allocation4], %s301
        %s303 = sand.u32 %s140, 1
        %s304 = smul.addr %s303, 16
        %s305 = scalar_lea.vmem [#allocation8], %s304
        %s306 = smul.u32 2, %s29
        %s307 = smul.u32 2, %s29
        %s308 = smul.u32 2, %s29
        %v311 = vld [vmem:[%s252] sm:$0xff]
        %v312 = vld [vmem:[%s252 + $0x8] sm:$0xff]
        %v313 = vmul.f32 %v311, 0.25
        %v314 = vmul.f32 %v312, 0.25
        %v315 = vld [vmem:[%s262] sm:$0xff]
        %v316 = vld [vmem:[%s262 + $0x8] sm:$0xff]
        %vm317 = vcmask 130048
        %v319 = vsel %vm317, %v313, 0
        %v322 = vsel %vm317, %v315, 0
        %324 = vmatpush.xpose.msra.mxu0 0.0
        %325 = vmatpush.xpose.msra.mxu0 0.0
        %326 = vmatpush.xpose.msra.mxu0 0.0
        %327 = vmatpush.xpose.msra.mxu0 0.0
        %328 = vmatpush.xpose.msra.mxu0 0.0
        %329 = vmatpush.xpose.msra.mxu0 0.0
        %330 = vmatpush.xpose.msra.mxu0 0.0
        %331 = vmatpush.xpose.msra.mxu0 0.0
        %332 = vmatpush.xpose.msra.mxu0 0.0
        %333 = vmatpush.xpose.msra.mxu0 0.0
        %334 = vmatpush.xpose.msra.mxu0 0.0
        %335 = vmatpush.xpose.msra.mxu0 0.0
        %336 = vmatpush.xpose.msra.mxu0 0.0
        %337 = vmatpush.xpose.msra.mxu0 0.0
        %338 = vmatpush.xpose.msra.mxu0 0.0
        %339 = vmatpush.xpose.msra.mxu0 %v322
        %340 = vmatmul.f32.gmra.mxu0 %v319
        %v341 = vpop.f32.mrf.mxu0
        %v342 = vadd.f32 0.0, %v341
        %343 = vdwg.mxu0
        %v345 = vsel %vm317, %v314, 0
        %v348 = vsel %vm317, %v316, 0
        %350 = vmatpush.xpose.msra.mxu0 0.0
        %351 = vmatpush.xpose.msra.mxu0 0.0
        %352 = vmatpush.xpose.msra.mxu0 0.0
        %353 = vmatpush.xpose.msra.mxu0 0.0
        %354 = vmatpush.xpose.msra.mxu0 0.0
        %355 = vmatpush.xpose.msra.mxu0 0.0
        %356 = vmatpush.xpose.msra.mxu0 0.0
        %357 = vmatpush.xpose.msra.mxu0 0.0
        %358 = vmatpush.xpose.msra.mxu0 0.0
        %359 = vmatpush.xpose.msra.mxu0 0.0
        %360 = vmatpush.xpose.msra.mxu0 0.0
        %361 = vmatpush.xpose.msra.mxu0 0.0
        %362 = vmatpush.xpose.msra.mxu0 0.0
        %363 = vmatpush.xpose.msra.mxu0 0.0
        %364 = vmatpush.xpose.msra.mxu0 0.0
        %365 = vmatpush.xpose.msra.mxu0 %v348
        %366 = vmatmul.f32.gmra.mxu0 %v345
        %v367 = vpop.f32.mrf.mxu0
        %v368 = vadd.f32 0.0, %v367
        %369 = vdwg.mxu0
        %v370 = vlaneseq
        %v371 = vand.u32 %v370, 127
        %vm372 = vcmp.eq.s32.totalorder %v371, 0
        %v373 = vld [vmem:[%s272] sm:$0x3]
        %vm374 = vnez %v373
        %vm375 = vmpackc.low %vm372, %vm372
        %v376 = vsel %vm375, 16711935, 0
        %v377 = vsel %vm375, 16711935, 0
        %v378 = vpack.c.b8 %v377, %v376
        %vm379 = vnez %v378
        %vm380 = vmor %vm374, %vm379
        %v381 = vsel %vm380, 16843009, 0
        %v382 = vunpack.c.0.s8 %v381
        %vm383 = vcmp.ne.s32.totalorder %v382, 0
        %v384 = vsel %vm383, 1, 0
        %vm385 = vcmp.eq.s32.totalorder %v384, 1
        %v386 = vsel %vm385, %v342, -inf
        %v387 = vsel %vm385, %v368, -inf
        %vm388 = vcmask 64512
        %v389 = vsel %vm388, %v386, -inf
        %390 = vmax.xlane.f32.xlu0 %v389
        %v391 = vpop.xlane.xlu0 %390
        %v392 = vsel %vm388, %v387, -inf
        %393 = vmax.xlane.f32.xlu0 %v392
        %v394 = vpop.xlane.xlu0 %393
        %v395 = vsub.f32 %v386, %v391
        %v396 = vsub.f32 %v387, %v394
        %v397 = vmul.f32 %v395, 1.442695
        %v398 = vpow.pop %v397
        %v399 = vmul.f32 %v396, 1.442695
        %v400 = vpow.pop %v399
        %v401 = vsel %vm388, %v398, 0.0
        %402 = vadd.xlane.f32.xlu0 %v401
        %v403 = vpop.xlane.xlu0 %402
        %v404 = vsel %vm388, %v400, 0.0
        %405 = vadd.xlane.f32.xlu0 %v404
        %v406 = vpop.xlane.xlu0 %405
        %v407 = vrcp.pop %v403
        %v408 = vrcp.pop %v406
        %v409 = vmul.f32 %v398, %v407
        %v410 = vmul.f32 %v400, %v408
        %411 = vst.msk [vmem:[%s305] sm:$0xff] %vm388, %v409
        %412 = vst.msk [vmem:[%s305 + $0x8] sm:$0xff] %vm388, %v410
        %s413 = sand.u32 %s140, 1
        %s414 = scalar_lea.sflag [#allocation4], %s413
        %s415 = sand.u32 %s140, 1
        %s416 = smul.addr %s415, 16
        %s417 = scalar_lea.vmem [#allocation8], %s416
        // Predicated region
        $region45: #{tpu_custom_call.1} parent=31 // pred_check
          %p418 = pneg %p150
        $region46: #{tpu_custom_call.1} parent=31 // pred_check_branch
          %420 = sbr.rel (%p418) target = $region48
        $region47: #{tpu_custom_call.1} parent=31 // pred_region
          %s421 = smul.u32 2, %s29
          %423 = vsyncadd %s414, 0
          %s424 = sadd.s32 %s30, %s421
          %s425 = smul.addr %s28, 2
          %s426 = sadd.s32 %s424, %s425
          %s427 = smul.addr %s426, 8
          %s428 = scalar_lea.hbm %s3, %s427
          %s429 = sshll.u32 %s417, 4
          %s430 = int_to_ptr.vmem [resolvable:$true] %s429
          %s431 = sshll.u32 %s428, 4
          %s432 = int_to_ptr.hbm [resolvable:$true] %s431
          %437 = dma.vmem_to_hbm [thread:$0]  %s430, 256, %s432, %s414, 128, 128, 8
        $region48: #{tpu_custom_call.1} parent=31 // pred_fallthru
          _
      $region32: #{tpu_custom_call.1} parent=5 // pred_fallthru
        _
      %p438 = scmp.le.s32.totalorder 2, %s18
      // Predicated region
      $region49: #{tpu_custom_call.1} parent=5 // pred_check
        %p439 = pneg %p438
      $region50: #{tpu_custom_call.1} parent=5 // pred_check_branch
        %441 = sbr.rel (%p439) target = $region52
      $region51: #{tpu_custom_call.1} parent=5 // pred_region
        %s442 = ssub.s32 %s18, 2
        // Predicated region
        $region53: #{tpu_custom_call.1} parent=51 // pred_check
          %p443 = pneg %p156
        $region54: #{tpu_custom_call.1} parent=51 // pred_check_branch
          %445 = sbr.rel (%p443) target = $region56
        $region55: #{tpu_custom_call.1} parent=51 // pred_region
          %s446 = sand.u32 %s141, 1
          %s447 = scalar_lea.sflag [#allocation4], %s446
          %s448 = sand.u32 %s141, 1
          %s449 = smul.addr %s448, 16
          %s450 = scalar_lea.vmem [#allocation8], %s449
          %452 = dma.done %s447, 256
        $region56: #{tpu_custom_call.1} parent=51 // pred_fallthru
          _
      $region52: #{tpu_custom_call.1} parent=5 // pred_fallthru
        _
    $region6: #{tpu_custom_call.1} parent=1 // loop_footer
      %s22 = sadd.s32 1, %s18
    $region7: #{tpu_custom_call.1} parent=1 // loop_footer_branch
      %17 = sbr.rel target = $region3
    $region8: #{tpu_custom_call.1} parent=1 // loop_exit
      _
    %453 = vsyncpa [#allocation3], 1
    %s454 = scalar_lea.sflag [#allocation3], 1
    %455 = vsyncpa %s454, 1
    %456 = vsyncpa [#allocation6], 1
    %s457 = scalar_lea.sflag [#allocation6], 1
    %458 = vsyncpa %s457, 1
    %459 = vsyncpa [#allocation4], 1
    %s460 = scalar_lea.sflag [#allocation4], 1
    %461 = vsyncpa %s460, 1

</llo_original>
